<compile_context>
chip_gen: v7x
topology: tpu7x:2x2x1
jax: 0.10.0
libtpu: 0.0.40
codegen_flags: <defaults>
</compile_context>

<pallas_src>
import jax
import jax.numpy as jnp
from jax.experimental import pallas as pl
from jax.experimental.pallas import tpu as pltpu

STATE_SPACE = 4      # env.observation_space.shape[0] for CartPole-v1
HIDDEN = 128         # hidden width of the original module (fused away in eval)
ACTION_SPACE = 2     # env.action_space.n for CartPole-v1
LANE = 128           # lane width (f32)
SMALL_BATCH_MAX = 512   # <= this: single-shot latency path (no pad/transpose)
MAX_TILE_B = 2048       # batch lanes per grid step on the throughput path


def _policy_kernel_small(x_ref, w_ref, o_ref):
    """Latency path. x_ref: (B, 4) VMEM f32; w_ref: (2, 4) SMEM f32;
    o_ref: (B, 2) VMEM f32 action probabilities."""
    # d = l0 - l1 = sum_k (w[0,k] - w[1,k]) * x[:, k]   -- K=4 unrolled on the VPU.
    d = (w_ref[0, 0] - w_ref[1, 0]) * x_ref[:, 0:1]
    for k in range(1, STATE_SPACE):
        d = d + (w_ref[0, k] - w_ref[1, k]) * x_ref[:, k:k + 1]
    # Exact 2-class softmax (sigmoid form): rows sum to 1 to within a ULP.
    p0 = 1.0 / (1.0 + jnp.exp(-d))
    o_ref[:, 0:1] = p0
    o_ref[:, 1:2] = 1.0 - p0


def _policy_kernel_big(x_ref, w_ref, o_ref):
    """Throughput path, batch-in-lanes. x_ref: (4, tile_b) VMEM f32;
    w_ref: (2, 4) SMEM f32; o_ref: (2, tile_b) VMEM f32."""
    d = (w_ref[0, 0] - w_ref[1, 0]) * x_ref[0:1, :]
    for k in range(1, STATE_SPACE):
        d = d + (w_ref[0, k] - w_ref[1, k]) * x_ref[k:k + 1, :]
    p0 = 1.0 / (1.0 + jnp.exp(-d))          # (1, tile_b), lane-dense
    o_ref[0:1, :] = p0
    o_ref[1:2, :] = 1.0 - p0


def fuse_policy_weights(w1_t, w2_t):
    """Eval-mode fusion of the two bias-free linears (dropout == identity):
    softmax((x @ w1_t) @ w2_t) == softmax(x @ (w1_t @ w2_t)).
    Returns the fused weight as (ACTION_SPACE, STATE_SPACE) so the kernels
    compute logits^T = W_fused @ x^T. Precompute once for repeated rollouts."""
    return jnp.dot(w2_t.astype(jnp.float32).T, w1_t.astype(jnp.float32).T,
                   precision=jax.lax.Precision.HIGHEST)


@jax.jit
def policy_forward_fused(x, w_fused):
    """Forward pass given the pre-fused (2, 4) weight. x: (B, 4) or (4,)."""
    squeeze = (x.ndim == 1)
    if squeeze:
        x = x[None, :]
    B = x.shape[0]
    x = x.astype(jnp.float32)
    w_fused = w_fused.astype(jnp.float32)

    if B <= SMALL_BATCH_MAX:
        # Latency path: full-array blocks (exempt from the (8,128) rule),
        # no padding, no transpose, no output slice.
        out = pl.pallas_call(
            _policy_kernel_small,
            out_shape=jax.ShapeDtypeStruct((B, ACTION_SPACE), jnp.float32),
            in_specs=[
                pl.BlockSpec(memory_space=pltpu.MemorySpace.VMEM),
                pl.BlockSpec(memory_space=pltpu.MemorySpace.SMEM),
            ],
            out_specs=pl.BlockSpec(memory_space=pltpu.MemorySpace.VMEM),
        )(x, w_fused)
    else:
        # Throughput path: batch in lanes. Pick tile_b as a multiple of 128,
        # capped at MAX_TILE_B, and such that the grid has >= 2 steps so the
        # "parallel" batch axis can shard across both TensorCores on v7x.
        b128 = ((B + LANE - 1) // LANE) * LANE
        tile_b = min(MAX_TILE_B, max(LANE, (b128 // 2 // LANE) * LANE))
        b_pad = ((b128 + tile_b - 1) // tile_b) * tile_b
        x_t = jnp.pad(x.T, ((0, 0), (0, b_pad - B)))        # (4, b_pad)

        out_t = pl.pallas_call(
            _policy_kernel_big,
            out_shape=jax.ShapeDtypeStruct((ACTION_SPACE, b_pad), jnp.float32),
            grid=(b_pad // tile_b,),
            in_specs=[
                pl.BlockSpec((STATE_SPACE, tile_b), lambda i: (0, i)),
                pl.BlockSpec(memory_space=pltpu.MemorySpace.SMEM),
            ],
            out_specs=pl.BlockSpec((ACTION_SPACE, tile_b), lambda i: (0, i)),
            compiler_params=pltpu.CompilerParams(
                dimension_semantics=("parallel",)),
        )(x_t, w_fused)
        out = out_t[:, :B].T                                  # (B, 2)

    return out[0] if squeeze else out


@jax.jit
def policy_forward(x, w1_t, w2_t):
    """Policy.forward (eval mode).

    x:    (B, 4) or (4,) observations
    w1_t: (4, 128)  = l1.weight.T
    w2_t: (128, 2)  = l2.weight.T
    returns action probabilities with the same leading shape as x.
    """
    return policy_forward_fused(x, fuse_policy_weights(w1_t, w2_t))


def _reference_forward(x, w1_t, w2_t):
    h = jnp.dot(x.astype(jnp.float32), w1_t.astype(jnp.float32),
                precision=jax.lax.Precision.HIGHEST)
    logits = jnp.dot(h, w2_t.astype(jnp.float32),
                     precision=jax.lax.Precision.HIGHEST)
    return jax.nn.softmax(logits, axis=-1)


if __name__ == "__main__":
    key = jax.random.PRNGKey(0)
    k_x1, k_x2, k_w1, k_w2 = jax.random.split(key, 4)

    # Synthetic parameters, uniform(-1/sqrt(fan_in), 1/sqrt(fan_in)) like
    # torch's default Linear init.
    bound1 = 1.0 / (STATE_SPACE ** 0.5)
    bound2 = 1.0 / (HIDDEN ** 0.5)
    w1_t = jax.random.uniform(k_w1, (STATE_SPACE, HIDDEN), jnp.float32,
                              minval=-bound1, maxval=bound1)
    w2_t = jax.random.uniform(k_w2, (HIDDEN, ACTION_SPACE), jnp.float32,
                              minval=-bound2, maxval=bound2)

    # 1) Small-batch latency path (the RL rollout case).
    x_small = jax.random.normal(k_x1, (2, STATE_SPACE), jnp.float32)
    out_small = jax.block_until_ready(policy_forward(x_small, w1_t, w2_t))
    ref_small = _reference_forward(x_small, w1_t, w2_t)
    assert out_small.shape == (2, ACTION_SPACE)
    assert jnp.allclose(out_small, ref_small, atol=1e-3, rtol=1e-3)
    assert jnp.allclose(jnp.sum(out_small, axis=-1), 1.0, atol=1e-5)

    # 2) Large-batch throughput path (transposed, gridded, megacore-parallel).
    x_big = jax.random.normal(k_x2, (777, STATE_SPACE), jnp.float32)
    out_big = jax.block_until_ready(policy_forward(x_big, w1_t, w2_t))
    ref_big = _reference_forward(x_big, w1_t, w2_t)
    assert out_big.shape == (777, ACTION_SPACE)
    assert jnp.allclose(out_big, ref_big, atol=1e-3, rtol=1e-3)
    assert jnp.allclose(jnp.sum(out_big, axis=-1), 1.0, atol=1e-5)

    print("KERNEL_OK")
</pallas_src>

<mosaic_0001>
module attributes {stable_mosaic.version = 11 : i64} {
  func.func @_policy_kernel_small(%arg0: memref<2x4xf32, #tpu.memory_space<vmem>>, %arg1: memref<2x4xf32, #tpu.memory_space<smem>>, %arg2: memref<2x2xf32, #tpu.memory_space<vmem>>) attributes {dimension_semantics = [], scalar_prefetch = 0 : i64, scratch_operands = 0 : i64, tpu.core_type = #tpu.core_type<tc>} {
    %c0 = arith.constant 0 : index
    %c0_0 = arith.constant 0 : index
    %0 = memref.load %arg1[%c0, %c0_0] : memref<2x4xf32, #tpu.memory_space<smem>>
    %c1 = arith.constant 1 : index
    %c0_1 = arith.constant 0 : index
    %1 = memref.load %arg1[%c1, %c0_1] : memref<2x4xf32, #tpu.memory_space<smem>>
    %2 = arith.subf %0, %1 : f32
    %c0_2 = arith.constant 0 : index
    %c0_3 = arith.constant 0 : index
    %3 = vector.load %arg0[%c0_2, %c0_3] : memref<2x4xf32, #tpu.memory_space<vmem>>, vector<2x1xf32>
    %4 = vector.broadcast %2 : f32 to vector<2x1xf32>
    %5 = arith.mulf %4, %3 : vector<2x1xf32>
    %c0_4 = arith.constant 0 : index
    %c1_5 = arith.constant 1 : index
    %6 = memref.load %arg1[%c0_4, %c1_5] : memref<2x4xf32, #tpu.memory_space<smem>>
    %c1_6 = arith.constant 1 : index
    %c1_7 = arith.constant 1 : index
    %7 = memref.load %arg1[%c1_6, %c1_7] : memref<2x4xf32, #tpu.memory_space<smem>>
    %8 = arith.subf %6, %7 : f32
    %c0_8 = arith.constant 0 : index
    %c1_9 = arith.constant 1 : index
    %9 = vector.load %arg0[%c0_8, %c1_9] : memref<2x4xf32, #tpu.memory_space<vmem>>, vector<2x1xf32>
    %10 = vector.broadcast %8 : f32 to vector<2x1xf32>
    %11 = arith.mulf %10, %9 : vector<2x1xf32>
    %12 = arith.addf %5, %11 : vector<2x1xf32>
    %c0_10 = arith.constant 0 : index
    %c2 = arith.constant 2 : index
    %13 = memref.load %arg1[%c0_10, %c2] : memref<2x4xf32, #tpu.memory_space<smem>>
    %c1_11 = arith.constant 1 : index
    %c2_12 = arith.constant 2 : index
    %14 = memref.load %arg1[%c1_11, %c2_12] : memref<2x4xf32, #tpu.memory_space<smem>>
    %15 = arith.subf %13, %14 : f32
    %c0_13 = arith.constant 0 : index
    %c2_14 = arith.constant 2 : index
    %16 = vector.load %arg0[%c0_13, %c2_14] : memref<2x4xf32, #tpu.memory_space<vmem>>, vector<2x1xf32>
    %17 = vector.broadcast %15 : f32 to vector<2x1xf32>
    %18 = arith.mulf %17, %16 : vector<2x1xf32>
    %19 = arith.addf %12, %18 : vector<2x1xf32>
    %c0_15 = arith.constant 0 : index
    %c3 = arith.constant 3 : index
    %20 = memref.load %arg1[%c0_15, %c3] : memref<2x4xf32, #tpu.memory_space<smem>>
    %c1_16 = arith.constant 1 : index
    %c3_17 = arith.constant 3 : index
    %21 = memref.load %arg1[%c1_16, %c3_17] : memref<2x4xf32, #tpu.memory_space<smem>>
    %22 = arith.subf %20, %21 : f32
    %c0_18 = arith.constant 0 : index
    %c3_19 = arith.constant 3 : index
    %23 = vector.load %arg0[%c0_18, %c3_19] : memref<2x4xf32, #tpu.memory_space<vmem>>, vector<2x1xf32>
    %24 = vector.broadcast %22 : f32 to vector<2x1xf32>
    %25 = arith.mulf %24, %23 : vector<2x1xf32>
    %26 = arith.addf %19, %25 : vector<2x1xf32>
    %cst = arith.constant 0.000000e+00 : f32
    %27 = vector.broadcast %cst : f32 to vector<2x1xf32>
    %28 = arith.subf %27, %26 : vector<2x1xf32>
    %29 = math.exp %28 : vector<2x1xf32>
    %cst_20 = arith.constant 1.000000e+00 : f32
    %30 = vector.broadcast %cst_20 : f32 to vector<2x1xf32>
    %31 = arith.addf %30, %29 : vector<2x1xf32>
    %cst_21 = arith.constant 1.000000e+00 : f32
    %32 = vector.broadcast %cst_21 : f32 to vector<2x1xf32>
    %33 = arith.divf %32, %31 : vector<2x1xf32>
    %c0_22 = arith.constant 0 : index
    %c0_23 = arith.constant 0 : index
    %34 = vector.load %arg2[%c0_22, %c0_23] : memref<2x2xf32, #tpu.memory_space<vmem>>, vector<2x1xf32>
    tpu.vector_store %arg2[%c0_22, %c0_23], %33 {strides = array<i32>} : memref<2x2xf32, #tpu.memory_space<vmem>>, vector<2x1xf32>,
    %cst_24 = arith.constant 1.000000e+00 : f32
    %35 = vector.broadcast %cst_24 : f32 to vector<2x1xf32>
    %36 = arith.subf %35, %33 : vector<2x1xf32>
    %c0_25 = arith.constant 0 : index
    %c1_26 = arith.constant 1 : index
    %37 = vector.load %arg2[%c0_25, %c1_26] : memref<2x2xf32, #tpu.memory_space<vmem>>, vector<2x1xf32>
    tpu.vector_store %arg2[%c0_25, %c1_26], %36 {strides = array<i32>} : memref<2x2xf32, #tpu.memory_space<vmem>>, vector<2x1xf32>,
    return
  }
}

</mosaic_0001>

<llo_original>
// kernel: policy_forward_fused.1
$region0: #{policy_forward_fused.1}
  #allocation0 [shape = 'u32[]', space=smem, size = 0x4, offset = 0x4, fixed_abs, tag = 'smem constant byte address 0x4 - core index']
  #allocation1 [shape = 'u32[144,128]{1,0:T(1,128)}', space=vmem, size = 0x12000, scoped, tag = 'internal scratch']
  %s0 = inlined_call_operand.hbm [shape: f32[2,4], index: 0, kind: input, shape index: {}]
  %s1 = inlined_call_operand.vmem [shape: f32[2,4], index: 1, kind: input, shape index: {}]
  %s2 = inlined_call_operand.hbm [shape: f32[2,2], index: 2, kind: output, shape index: {}]
  %s3 = sld [smem:[#allocation0]]
  $region26: #{policy_forward_fused.1} parent=0
    _
  %s5 = ssub.s32 1, %s3
  %s6 = scalar_select 0, %s5, %s3
  $region1: #{policy_forward_fused.1} parent=0
    #allocation2 [shape = 'u8[1024]{0}', space=vmem, size = 0x400, scoped, tag = 'input window, operand 0, single buffered']
    #allocation3 [shape = 's32[1]{0}', space=sflag, size = 0x4, scoped, tag = 'scoped memory for policy_forward_fused.1']
    #allocation4 [shape = 's32[1]{0}', space=sflag, size = 0x4, scoped, tag = 'scoped memory for policy_forward_fused.1']
    #allocation5 [shape = 's32[1]{0}', space=sflag, size = 0x4, scoped, tag = 'scoped memory for policy_forward_fused.1']
    #allocation6 [shape = 'u8[1024]{0}', space=smem, size = 0x400, scoped, tag = 'input window, operand 1, single buffered']
    #allocation7 [shape = 'u8[1024]{0}', space=vmem, size = 0x400, scoped, tag = 'output window, operand 0, single buffered']
    %7 = vsyncpa [#allocation3], 0
    %8 = vsyncpa [#allocation5], 0
    %9 = vsyncpa [#allocation4], 0
    // Predicated region
    $region2: #{policy_forward_fused.1} parent=1 // pred_check
      _
    $region3: #{policy_forward_fused.1} parent=1 // pred_check_branch
      %11 = sbr.rel (0) target = $region5
    $region4: #{policy_forward_fused.1} parent=1 // pred_region
      %s13 = ssub.s32 32, 32
      %14 = vsyncadd [#allocation3], %s13
      %s16 = sshll.u32 [#allocation2], 4
      %s17 = int_to_ptr.vmem [resolvable:$true] %s16
      %19 = dma.hbm_to_vmem [thread:$0]  %s0, 32, %s17, [#allocation3]
    $region5: #{policy_forward_fused.1} parent=1 // pred_fallthru
      _
    // Predicated region
    $region6: #{policy_forward_fused.1} parent=1 // pred_check
      _
    $region7: #{policy_forward_fused.1} parent=1 // pred_check_branch
      %21 = sbr.rel (0) target = $region9
    $region8: #{policy_forward_fused.1} parent=1 // pred_region
      %s23 = ssub.s32 32, 32
      %24 = vsyncadd [#allocation5], %s23
      %s26 = sshll.u32 %s1, 4
      %s27 = int_to_ptr.vmem [resolvable:$true] %s26
      %29 = dma.vmem_to_smem %s27, 32, [#allocation6], [#allocation5]
    $region9: #{policy_forward_fused.1} parent=1 // pred_fallthru
      _
    // Predicated region
    $region10: #{policy_forward_fused.1} parent=1 // pred_check
      _
    $region11: #{policy_forward_fused.1} parent=1 // pred_check_branch
      %31 = sbr.rel (0) target = $region13
    $region12: #{policy_forward_fused.1} parent=1 // pred_region
      %32 = dma.done [#allocation3], 32
    $region13: #{policy_forward_fused.1} parent=1 // pred_fallthru
      _
    // Predicated region
    $region14: #{policy_forward_fused.1} parent=1 // pred_check
      _
    $region15: #{policy_forward_fused.1} parent=1 // pred_check_branch
      %34 = sbr.rel (0) target = $region17
    $region16: #{policy_forward_fused.1} parent=1 // pred_region
      %35 = dma.done [#allocation5], 32
    $region17: #{policy_forward_fused.1} parent=1 // pred_fallthru
      _
    %36 = sfence
    %s37 = sld [smem:[#allocation6]]
    %s38 = sld [smem:[#allocation6 + $0x80]]
    %s39 = ssub.f32 %s37, %s38
    %v40 = vld [vmem:[#allocation2] sm:$0x3]
    %v41 = vstv %s39
    %v42 = vmul.f32 %v41, %v40
    %s43 = sld [smem:[#allocation6 + $0x1]]
    %s44 = sld [smem:[#allocation6 + $0x81]]
    %s45 = ssub.f32 %s43, %s44
    %v46 = vstv %s45
    %v47 = vmul.f32 %v46, %v40
    %49 = vrot.lane.b32.xlu0 %v47, 127
    %v50 = vpop.permute.xlu0 %49
    %v52 = vadd.f32 %v42, %v50
    %s53 = sld [smem:[#allocation6 + $0x2]]
    %s54 = sld [smem:[#allocation6 + $0x82]]
    %s55 = ssub.f32 %s53, %s54
    %v56 = vstv %s55
    %v57 = vmul.f32 %v56, %v40
    %59 = vrot.lane.b32.xlu0 %v57, 126
    %v60 = vpop.permute.xlu0 %59
    %v62 = vadd.f32 %v52, %v60
    %s63 = sld [smem:[#allocation6 + $0x3]]
    %s64 = sld [smem:[#allocation6 + $0x83]]
    %s65 = ssub.f32 %s63, %s64
    %v66 = vstv %s65
    %v67 = vmul.f32 %v66, %v40
    %69 = vrot.lane.b32.xlu0 %v67, 125
    %v70 = vpop.permute.xlu0 %69
    %v72 = vadd.f32 %v62, %v70
    %v73 = vsub.f32 0.0, %v72
    %v74 = vmul.f32 %v73, 1.442695
    %v75 = vpow.pop %v74
    %v76 = vadd.f32 %v75, 1.0
    %v77 = vrcp.pop %v76
    %v78 = vmul.f32 1.0, %v77
    %vm79 = vcmask 1024
    %80 = vst.msk [vmem:[#allocation7] sm:$0x3] %vm79, %v78
    %v81 = vsub.f32 1.0, %v78
    %83 = vrot.lane.b32.xlu0 %v81, 1
    %v84 = vpop.permute.xlu0 %83
    %vm86 = vcmask 9224
    %87 = vst.msk [vmem:[#allocation7] sm:$0x3] %vm86, %v84
    // Predicated region
    $region18: #{policy_forward_fused.1} parent=1 // pred_check
      _
    $region19: #{policy_forward_fused.1} parent=1 // pred_check_branch
      %89 = sbr.rel (0) target = $region21
    $region20: #{policy_forward_fused.1} parent=1 // pred_region
      %s91 = ssub.s32 32, 32
      %92 = vsyncadd [#allocation4], %s91
      %s94 = sshll.u32 [#allocation7], 4
      %s95 = int_to_ptr.vmem [resolvable:$true] %s94
      %97 = dma.vmem_to_hbm [thread:$0]  %s95, 32, %s2, [#allocation4]
    $region21: #{policy_forward_fused.1} parent=1 // pred_fallthru
      _
    // Predicated region
    $region22: #{policy_forward_fused.1} parent=1 // pred_check
      _
    $region23: #{policy_forward_fused.1} parent=1 // pred_check_branch
      %99 = sbr.rel (0) target = $region25
    $region24: #{policy_forward_fused.1} parent=1 // pred_region
      %100 = dma.done [#allocation4], 32
    $region25: #{policy_forward_fused.1} parent=1 // pred_fallthru
      _
    %101 = vsyncpa [#allocation3], 1
    %102 = vsyncpa [#allocation4], 1
    %103 = vsyncpa [#allocation5], 1

</llo_original>
